<compile_context>
chip_gen: v7x
topology: tpu7x:2x2x1
jax: 0.10.0
libtpu: 0.0.40
codegen_flags: <defaults>
</compile_context>

<pallas_src>
import functools

import jax
import jax.numpy as jnp
from jax import lax
from jax.experimental import pallas as pl
from jax.experimental.pallas import tpu as pltpu

_LANE = 128
_SUBLANE = 8


def _ray_loss_kernel(pred_ref, rd_ref, types_ref, pts_ref, out_ref,
                     acc_ref, carry_ref, *, n, nb_per_core, blk_rows):
    L = _LANE
    R = blk_rows
    c = pl.program_id(0)          # which core / half of the sample range
    b = pl.program_id(1)          # sequential row-block index within the half

    @pl.when(b == 0)
    def _init():
        acc_ref[...] = jnp.zeros_like(acc_ref)
        carry_ref[...] = jnp.zeros_like(carry_ref)

    row = lax.broadcasted_iota(jnp.int32, (R, L), 0)
    lane = lax.broadcasted_iota(jnp.int32, (R, L), 1)
    blk_start = (c * nb_per_core + b) * (R * L)
    gidx = blk_start + row * L + lane          # global (flattened) sample id
    valid_n = gidx < n                         # masks pad / undefined tail

    pred = pred_ref[...]
    below = rd_ref[0]                          # gt_targets[:, 0]
    above = rd_ref[1]                          # gt_targets[:, 1]
    t = types_ref[...]

    # ---- type-selected equality loss -------------------------------------
    abs_pb = jnp.abs(pred - below)
    abs_pa = jnp.abs(pred - above)
    s_closer = jnp.abs(below) < jnp.abs(above)
    ii = jnp.where(s_closer, abs_pb, abs_pa)                             # II
    mid = (below + above) * 0.5
    halfw = (above - below) * 0.5
    oo = jnp.maximum(halfw - jnp.abs(pred - mid), 0.0)                   # OO
    io = jnp.where(s_closer, abs_pb,
                   jnp.minimum(jnp.maximum(above - pred, 0.0), abs_pb))  # IO
    oi = jnp.where(s_closer,
                   jnp.minimum(jnp.maximum(pred - below, 0.0), abs_pa),
                   abs_pa)                                               # OI
    loss = jnp.where(t == 1, ii,
           jnp.where(t == 2, oo,
           jnp.where(t == 3, io,
           jnp.where(t == 4, oi,
           jnp.where(t == 5, abs_pa, 0.0)))))       # OI_start == abs_pa
    loss = jnp.where(valid_n, loss, 0.0)
    cnt = jnp.where(jnp.logical_and(valid_n, t > 0), 1.0, 0.0)

    # ---- gradient loss: (current - previous sample) diffs ----------------
    lane0 = lane == 0
    row0 = row == 0

    def prev_flat(x, ch):
        # value of x at flattened index j-1, laid out at position j; the
        # block-boundary value (r=0, l=0) comes from the carried last row of
        # this core's previous block.
        a = pltpu.roll(x, shift=1, axis=1)                 # x[r, l-1]
        bb = pltpu.roll(a, shift=1, axis=0)                # x[r-1, l-1]
        cr = pltpu.roll(carry_ref[ch], shift=1, axis=1)    # (1,L); [0,0]=prev
        cb = jnp.broadcast_to(cr, (R, L))
        return jnp.where(lane0, jnp.where(row0, cb, bb), a)

    y_diff = pred - prev_flat(pred, 0)
    num_coords = pts_ref.shape[0]
    sumsq = None
    for ci in range(num_coords):                           # D is tiny: unroll
        xs = pts_ref[ci]
        xd = xs - prev_flat(xs, ci + 1)
        sumsq = xd * xd if sumsq is None else sumsq + xd * xd
    grad = y_diff * lax.rsqrt(sumsq)                       # y_diff / ||x_diff||
    term = jnp.where(grad > 0, 1.0, jnp.abs(grad + 1.0))
    # the first sample of core c>0 has its "previous" sample on the other
    # core; that single term is masked here and added back in the wrapper.
    junction = jnp.logical_and(jnp.logical_and(c > 0, b == 0),
                               jnp.logical_and(row0, lane0))
    g_valid = jnp.logical_and(jnp.logical_and(gidx >= 1, valid_n),
                              jnp.logical_not(junction))
    term = jnp.where(g_valid, term, 0.0)

    # carry this block's last sublane row for the next block's boundary diff
    carry_ref[0] = pred[R - 1:R, :]
    for ci in range(num_coords):
        carry_ref[ci + 1] = pts_ref[ci, R - 1:R, :]

    # ---- running partial sums (pure VPU; XLU reduce deferred) ------------
    acc_ref[0] += loss
    acc_ref[1] += cnt
    acc_ref[2] += term

    @pl.when(b == nb_per_core - 1)
    def _finalize():
        s_loss = jnp.sum(acc_ref[0])
        s_cnt = jnp.sum(acc_ref[1])
        s_term = jnp.sum(acc_ref[2])
        ri = lax.broadcasted_iota(jnp.int32, (_SUBLANE, L), 0)
        li = lax.broadcasted_iota(jnp.int32, (_SUBLANE, L), 1)
        r0 = ri == 0
        out_ref[0] = jnp.where(jnp.logical_and(r0, li == 0), s_loss,
                     jnp.where(jnp.logical_and(r0, li == 1), s_cnt,
                     jnp.where(jnp.logical_and(r0, li == 2), s_term, 0.0)))


def ray_model_forward(model_params, points, ray_distance, distance_loss_type,
                      *, block_rows=1024, num_cores=2):
    """model_params: (N,), points: (N, D), ray_distance: (N, 2),
    distance_loss_type: (N,) int. Returns {'equality': scalar, 'grad': scalar}."""
    n = int(model_params.shape[0])
    d = int(points.shape[1])
    L = _LANE
    slab = _SUBLANE * L

    # Lane-dense layout: sample i -> (row i // 128, lane i % 128).  When N is
    # a multiple of 8*128 the reshapes below are free bitcasts; only otherwise
    # do we pay one small pad pass.  ray_distance / points go channel-first
    # (one transpose pass, kept for lane density in the kernel).
    n_pad = ((n + slab - 1) // slab) * slab
    pad = n_pad - n
    r_total = n_pad // L

    pred1 = model_params.astype(jnp.float32)            # "* 1" is the identity
    types1 = distance_loss_type.astype(jnp.int32)
    rd_t = ray_distance.astype(jnp.float32).T            # (2, N)
    pts_t = points.astype(jnp.float32).T                 # (D, N)
    if pad:
        pred1 = jnp.pad(pred1, (0, pad))
        types1 = jnp.pad(types1, (0, pad))
        rd_t = jnp.pad(rd_t, ((0, 0), (0, pad)))
        pts_t = jnp.pad(pts_t, ((0, 0), (0, pad)))
    pred2 = pred1.reshape(r_total, L)
    types2 = types1.reshape(r_total, L)
    rd2 = rd_t.reshape(2, r_total, L)
    pts2 = pts_t.reshape(d, r_total, L)

    blk_r = min(block_rows, r_total)                     # multiple of 8
    nb_real = -(-r_total // blk_r)                       # real row-blocks
    nc = max(1, int(num_cores))
    nbpc = -(-nb_real // nc)                             # blocks per core
    last_blk = nb_real - 1

    def row_map2(c, b):                                  # (rows, lanes) inputs
        return (jnp.minimum(c * nbpc + b, last_blk), 0)

    def row_map3(c, b):                                  # (chan, rows, lanes)
        return (0, jnp.minimum(c * nbpc + b, last_blk), 0)

    kernel = functools.partial(_ray_loss_kernel, n=n, nb_per_core=nbpc,
                               blk_rows=blk_r)

    # double-buffered inputs + accumulators; explicit so v7x (64 MiB) is safe
    bytes_per_block = blk_r * L * (4 + 4 + 2 * 4 + d * 4)
    vmem_limit = int(min(32 * 1024 * 1024, 4 * bytes_per_block + (2 << 20)))

    out = pl.pallas_call(
        kernel,
        out_shape=jax.ShapeDtypeStruct((nc, _SUBLANE, L), jnp.float32),
        grid_spec=pltpu.PrefetchScalarGridSpec(
            num_scalar_prefetch=0,
            grid=(nc, nbpc),
            in_specs=[
                pl.BlockSpec((blk_r, L), row_map2),          # predictions
                pl.BlockSpec((2, blk_r, L), row_map3),       # below / above
                pl.BlockSpec((blk_r, L), row_map2),          # loss type codes
                pl.BlockSpec((d, blk_r, L), row_map3),       # point coords
            ],
            out_specs=pl.BlockSpec((1, _SUBLANE, L), lambda c, b: (c, 0, 0)),
            scratch_shapes=[
                pltpu.VMEM((3, blk_r, L), jnp.float32),      # running sums
                pltpu.VMEM((d + 1, 1, L), jnp.float32),      # boundary carry
            ],
        ),
        compiler_params=pltpu.CompilerParams(
            dimension_semantics=("parallel", "arbitrary"),
            vmem_limit_bytes=vmem_limit),
    )(pred2, rd2, types2, pts2)

    s_loss = jnp.sum(out[:, 0, 0])
    s_cnt = jnp.sum(out[:, 0, 1])
    s_term = jnp.sum(out[:, 0, 2])

    # Add back the one gradient term per core boundary that the kernel masks
    # out (its "previous" sample lives in the other core's range).
    for c in range(1, nc):
        j0 = c * nbpc * blk_r * L
        if 1 <= j0 < n:
            yd = (model_params[j0] - model_params[j0 - 1]).astype(jnp.float32)
            xd = (points[j0] - points[j0 - 1]).astype(jnp.float32)
            g = yd / jnp.sqrt(jnp.sum(xd * xd))
            s_term = s_term + jnp.where(g > 0, 1.0, jnp.abs(g + 1.0))

    equality = s_loss / s_cnt                    # mean over samples with t > 0
    denom = float(n - 1) if n > 1 else float("nan")
    grad = s_term / denom                        # mean over the n-1 diffs
    return {'equality': equality, 'grad': grad}


def ray_model_forward_ref(model_params, points, ray_distance, distance_loss_type):
    """Pure-JAX reference mirroring the PyTorch module."""
    pred = model_params * 1.0
    below = ray_distance[:, 0]
    above = ray_distance[:, 1]
    t = distance_loss_type
    abs_pb = jnp.abs(pred - below)
    abs_pa = jnp.abs(pred - above)
    s_closer = jnp.abs(below) < jnp.abs(above)
    ii = jnp.where(s_closer, abs_pb, abs_pa)
    oo = jnp.maximum((above - below) / 2 - jnp.abs(pred - (below + above) / 2), 0.0)
    io = jnp.where(s_closer, abs_pb,
                   jnp.minimum(jnp.maximum(above - pred, 0.0), abs_pb))
    oi = jnp.where(s_closer,
                   jnp.minimum(jnp.maximum(pred - below, 0.0), abs_pa), abs_pa)
    loss = (ii * (t == 1) + oo * (t == 2) + io * (t == 3)
            + oi * (t == 4) + abs_pa * (t == 5))
    valid = (t > 0).astype(jnp.float32)
    equality = jnp.sum(loss * valid) / jnp.sum(valid)
    y_diff = pred[1:] - pred[:-1]
    x_norm = jnp.linalg.norm(points[1:] - points[:-1], axis=1)
    grad = y_diff / x_norm
    term = (grad > 0).astype(jnp.float32) + (grad <= 0) * jnp.abs(grad + 1.0)
    return {'equality': equality, 'grad': term.mean()}


if __name__ == "__main__":
    key = jax.random.PRNGKey(0)
    num_ind = 256
    d = 3

    # Parameter init matches torch: normal(0, 1) * 0  ->  zeros(num_ind)
    model_params = jnp.zeros((num_ind,), jnp.float32)

    k1, k2, k3 = jax.random.split(key, 3)
    points = jax.random.normal(k1, (num_ind, d), jnp.float32)
    lo = jax.random.uniform(k2, (num_ind,), jnp.float32, -1.0, 0.0)
    hi = lo + jax.random.uniform(k3, (num_ind,), jnp.float32, 0.1, 1.0)
    ray_distance = jnp.stack([lo, hi], axis=1)                        # (N, 2)
    distance_loss_type = (jnp.arange(num_ind) % 6).astype(jnp.int32)  # 0..5

    fwd = jax.jit(ray_model_forward)
    losses = fwd(model_params, points, ray_distance, distance_loss_type)
    jax.block_until_ready(losses)

    ref = ray_model_forward_ref(model_params, points, ray_distance,
                                distance_loss_type)
    assert jnp.allclose(losses['equality'], ref['equality'], rtol=1e-5, atol=1e-5)
    assert jnp.allclose(losses['grad'], ref['grad'], rtol=1e-5, atol=1e-5)
    print("KERNEL_OK")
</pallas_src>

<mosaic_0001>
module attributes {stable_mosaic.version = 11 : i64} {
  func.func @_ray_loss_kernel(%arg0: i32, %arg1: i32, %arg2: memref<8x128xf32, #tpu.memory_space<vmem>>, %arg3: memref<2x8x128xf32, #tpu.memory_space<vmem>>, %arg4: memref<8x128xi32, #tpu.memory_space<vmem>>, %arg5: memref<3x8x128xf32, #tpu.memory_space<vmem>>, %arg6: memref<1x8x128xf32, #tpu.memory_space<vmem>>, %arg7: memref<3x8x128xf32, #tpu.memory_space<vmem>>, %arg8: memref<4x1x128xf32, #tpu.memory_space<vmem>>) attributes {dimension_semantics = [#tpu.dimension_semantics<parallel>, #tpu.dimension_semantics<arbitrary>], iteration_bounds = array<i64: 2, 1>, scalar_prefetch = 0 : i64, scratch_operands = 2 : i64, tpu.core_type = #tpu.core_type<tc>, window_params = [{transform_indices = @transform_0, window_bounds = array<i64: 8, 128>}, {transform_indices = @transform_1, window_bounds = array<i64: 2, 8, 128>}, {transform_indices = @transform_2, window_bounds = array<i64: 8, 128>}, {transform_indices = @transform_3, window_bounds = array<i64: 3, 8, 128>}, {transform_indices = @transform_4, window_bounds = array<i64: 1, 8, 128>}]} {
    %c0_i32 = arith.constant 0 : i32
    %0 = arith.cmpi eq, %arg1, %c0_i32 : i32
    %1 = arith.extui %0 : i1 to i32
    %c0_i32_0 = arith.constant 0 : i32
    %2 = arith.cmpi ne, %1, %c0_i32_0 : i32
    scf.if %2 {
      %cst_100 = arith.constant 0.000000e+00 : f32
      %191 = vector.broadcast %cst_100 : f32 to vector<3x8x128xf32>
      %c0_101 = arith.constant 0 : index
      %c0_102 = arith.constant 0 : index
      %c0_103 = arith.constant 0 : index
      %192 = vector.load %arg7[%c0_101, %c0_102, %c0_103] : memref<3x8x128xf32, #tpu.memory_space<vmem>>, vector<3x8x128xf32>
      tpu.vector_store %arg7[%c0_101, %c0_102, %c0_103], %191 {strides = array<i32>} : memref<3x8x128xf32, #tpu.memory_space<vmem>>, vector<3x8x128xf32>,
      %cst_104 = arith.constant 0.000000e+00 : f32
      %193 = vector.broadcast %cst_104 : f32 to vector<4x1x128xf32>
      %c0_105 = arith.constant 0 : index
      %c0_106 = arith.constant 0 : index
      %c0_107 = arith.constant 0 : index
      %194 = vector.load %arg8[%c0_105, %c0_106, %c0_107] : memref<4x1x128xf32, #tpu.memory_space<vmem>>, vector<4x1x128xf32>
      tpu.vector_store %arg8[%c0_105, %c0_106, %c0_107], %193 {strides = array<i32>} : memref<4x1x128xf32, #tpu.memory_space<vmem>>, vector<4x1x128xf32>,
    } else {
    }
    %3 = tpu.iota {dimensions = array<i32: 0>} : vector<8x128xi32>
    %4 = tpu.iota {dimensions = array<i32: 1>} : vector<8x128xi32>
    %c1_i32 = arith.constant 1 : i32
    %5 = arith.muli %arg0, %c1_i32 : i32
    %6 = arith.addi %5, %arg1 : i32
    %c1024_i32 = arith.constant 1024 : i32
    %7 = arith.muli %6, %c1024_i32 : i32
    %c128_i32 = arith.constant 128 : i32
    %8 = vector.broadcast %c128_i32 : i32 to vector<8x128xi32>
    %9 = arith.muli %3, %8 : vector<8x128xi32>
    %10 = vector.broadcast %7 : i32 to vector<8x128xi32>
    %11 = arith.addi %10, %9 : vector<8x128xi32>
    %12 = arith.addi %11, %4 : vector<8x128xi32>
    %c256_i32 = arith.constant 256 : i32
    %13 = vector.broadcast %c256_i32 : i32 to vector<8x128xi32>
    %14 = arith.cmpi slt, %12, %13 : vector<8x128xi32>
    %c0 = arith.constant 0 : index
    %c0_1 = arith.constant 0 : index
    %15 = vector.load %arg2[%c0, %c0_1] : memref<8x128xf32, #tpu.memory_space<vmem>>, vector<8x128xf32>
    %c0_2 = arith.constant 0 : index
    %c0_3 = arith.constant 0 : index
    %c0_4 = arith.constant 0 : index
    %16 = vector.load %arg3[%c0_2, %c0_3, %c0_4] : memref<2x8x128xf32, #tpu.memory_space<vmem>>, vector<1x8x128xf32>
    %17 = vector.shape_cast %16 : vector<1x8x128xf32> to vector<8x128xf32>
    %c1 = arith.constant 1 : index
    %c0_5 = arith.constant 0 : index
    %c0_6 = arith.constant 0 : index
    %18 = vector.load %arg3[%c1, %c0_5, %c0_6] : memref<2x8x128xf32, #tpu.memory_space<vmem>>, vector<1x8x128xf32>
    %19 = vector.shape_cast %18 : vector<1x8x128xf32> to vector<8x128xf32>
    %c0_7 = arith.constant 0 : index
    %c0_8 = arith.constant 0 : index
    %20 = vector.load %arg4[%c0_7, %c0_8] : memref<8x128xi32, #tpu.memory_space<vmem>>, vector<8x128xi32>
    %21 = arith.subf %15, %17 : vector<8x128xf32>
    %22 = math.absf %21 : vector<8x128xf32>
    %23 = arith.subf %15, %19 : vector<8x128xf32>
    %24 = math.absf %23 : vector<8x128xf32>
    %25 = math.absf %17 : vector<8x128xf32>
    %26 = math.absf %19 : vector<8x128xf32>
    %27 = arith.cmpf olt, %25, %26 : vector<8x128xf32>
    %28 = arith.select %27, %22, %24 : vector<8x128xi1>, vector<8x128xf32>
    %29 = arith.addf %17, %19 : vector<8x128xf32>
    %cst = arith.constant 5.000000e-01 : f32
    %30 = vector.broadcast %cst : f32 to vector<8x128xf32>
    %31 = arith.mulf %29, %30 : vector<8x128xf32>
    %32 = arith.subf %19, %17 : vector<8x128xf32>
    %cst_9 = arith.constant 5.000000e-01 : f32
    %33 = vector.broadcast %cst_9 : f32 to vector<8x128xf32>
    %34 = arith.mulf %32, %33 : vector<8x128xf32>
    %35 = arith.subf %15, %31 : vector<8x128xf32>
    %36 = math.absf %35 : vector<8x128xf32>
    %37 = arith.subf %34, %36 : vector<8x128xf32>
    %cst_10 = arith.constant 0.000000e+00 : f32
    %38 = vector.broadcast %cst_10 : f32 to vector<8x128xf32>
    %39 = arith.maximumf %37, %38 : vector<8x128xf32>
    %40 = arith.subf %19, %15 : vector<8x128xf32>
    %cst_11 = arith.constant 0.000000e+00 : f32
    %41 = vector.broadcast %cst_11 : f32 to vector<8x128xf32>
    %42 = arith.maximumf %40, %41 : vector<8x128xf32>
    %43 = arith.minimumf %42, %22 : vector<8x128xf32>
    %44 = arith.select %27, %22, %43 : vector<8x128xi1>, vector<8x128xf32>
    %45 = arith.subf %15, %17 : vector<8x128xf32>
    %cst_12 = arith.constant 0.000000e+00 : f32
    %46 = vector.broadcast %cst_12 : f32 to vector<8x128xf32>
    %47 = arith.maximumf %45, %46 : vector<8x128xf32>
    %48 = arith.minimumf %47, %24 : vector<8x128xf32>
    %49 = arith.select %27, %48, %24 : vector<8x128xi1>, vector<8x128xf32>
    %c1_i32_13 = arith.constant 1 : i32
    %50 = vector.broadcast %c1_i32_13 : i32 to vector<8x128xi32>
    %51 = arith.cmpi eq, %20, %50 : vector<8x128xi32>
    %c2_i32 = arith.constant 2 : i32
    %52 = vector.broadcast %c2_i32 : i32 to vector<8x128xi32>
    %53 = arith.cmpi eq, %20, %52 : vector<8x128xi32>
    %c3_i32 = arith.constant 3 : i32
    %54 = vector.broadcast %c3_i32 : i32 to vector<8x128xi32>
    %55 = arith.cmpi eq, %20, %54 : vector<8x128xi32>
    %c4_i32 = arith.constant 4 : i32
    %56 = vector.broadcast %c4_i32 : i32 to vector<8x128xi32>
    %57 = arith.cmpi eq, %20, %56 : vector<8x128xi32>
    %c5_i32 = arith.constant 5 : i32
    %58 = vector.broadcast %c5_i32 : i32 to vector<8x128xi32>
    %59 = arith.cmpi eq, %20, %58 : vector<8x128xi32>
    %cst_14 = arith.constant 0.000000e+00 : f32
    %60 = vector.broadcast %cst_14 : f32 to vector<8x128xf32>
    %61 = arith.select %59, %24, %60 : vector<8x128xi1>, vector<8x128xf32>
    %62 = arith.select %57, %49, %61 : vector<8x128xi1>, vector<8x128xf32>
    %63 = arith.select %55, %44, %62 : vector<8x128xi1>, vector<8x128xf32>
    %64 = arith.select %53, %39, %63 : vector<8x128xi1>, vector<8x128xf32>
    %65 = arith.select %51, %28, %64 : vector<8x128xi1>, vector<8x128xf32>
    %cst_15 = arith.constant 0.000000e+00 : f32
    %66 = vector.broadcast %cst_15 : f32 to vector<8x128xf32>
    %67 = arith.select %14, %65, %66 : vector<8x128xi1>, vector<8x128xf32>
    %c0_i32_16 = arith.constant 0 : i32
    %68 = vector.broadcast %c0_i32_16 : i32 to vector<8x128xi32>
    %69 = arith.cmpi sgt, %20, %68 : vector<8x128xi32>
    %70 = arith.andi %14, %69 : vector<8x128xi1>
    %cst_17 = arith.constant 1.000000e+00 : f32
    %cst_18 = arith.constant 0.000000e+00 : f32
    %71 = vector.broadcast %cst_17 : f32 to vector<8x128xf32>
    %72 = vector.broadcast %cst_18 : f32 to vector<8x128xf32>
    %73 = arith.select %70, %71, %72 : vector<8x128xi1>, vector<8x128xf32>
    %c0_i32_19 = arith.constant 0 : i32
    %74 = vector.broadcast %c0_i32_19 : i32 to vector<8x128xi32>
    %75 = arith.cmpi eq, %4, %74 : vector<8x128xi32>
    %c0_i32_20 = arith.constant 0 : i32
    %76 = vector.broadcast %c0_i32_20 : i32 to vector<8x128xi32>
    %77 = arith.cmpi eq, %3, %76 : vector<8x128xi32>
    %c1_i32_21 = arith.constant 1 : i32
    %78 = tpu.dynamic_rotate %15 by %c1_i32_21 dim 1 : vector<8x128xf32>, i32 -> vector<8x128xf32>
    %c1_i32_22 = arith.constant 1 : i32
    %79 = tpu.dynamic_rotate %78 by %c1_i32_22 dim 0 : vector<8x128xf32>, i32 -> vector<8x128xf32>
    %c0_23 = arith.constant 0 : index
    %c0_24 = arith.constant 0 : index
    %c0_25 = arith.constant 0 : index
    %80 = vector.load %arg8[%c0_23, %c0_24, %c0_25] : memref<4x1x128xf32, #tpu.memory_space<vmem>>, vector<1x1x128xf32>
    %81 = vector.shape_cast %80 : vector<1x1x128xf32> to vector<1x128xf32>
    %c1_i32_26 = arith.constant 1 : i32
    %82 = tpu.dynamic_rotate %81 by %c1_i32_26 dim 1 : vector<1x128xf32>, i32 -> vector<1x128xf32>
    %83 = vector.shape_cast %82 : vector<1x128xf32> to vector<1x128xf32>
    %84 = vector.broadcast %83 : vector<1x128xf32> to vector<8x128xf32>
    %85 = arith.select %77, %84, %79 : vector<8x128xi1>, vector<8x128xf32>
    %86 = arith.select %75, %85, %78 : vector<8x128xi1>, vector<8x128xf32>
    %87 = arith.subf %15, %86 : vector<8x128xf32>
    %c0_27 = arith.constant 0 : index
    %c0_28 = arith.constant 0 : index
    %c0_29 = arith.constant 0 : index
    %88 = vector.load %arg5[%c0_27, %c0_28, %c0_29] : memref<3x8x128xf32, #tpu.memory_space<vmem>>, vector<1x8x128xf32>
    %89 = vector.shape_cast %88 : vector<1x8x128xf32> to vector<8x128xf32>
    %c1_i32_30 = arith.constant 1 : i32
    %90 = tpu.dynamic_rotate %89 by %c1_i32_30 dim 1 : vector<8x128xf32>, i32 -> vector<8x128xf32>
    %c1_i32_31 = arith.constant 1 : i32
    %91 = tpu.dynamic_rotate %90 by %c1_i32_31 dim 0 : vector<8x128xf32>, i32 -> vector<8x128xf32>
    %c1_32 = arith.constant 1 : index
    %c0_33 = arith.constant 0 : index
    %c0_34 = arith.constant 0 : index
    %92 = vector.load %arg8[%c1_32, %c0_33, %c0_34] : memref<4x1x128xf32, #tpu.memory_space<vmem>>, vector<1x1x128xf32>
    %93 = vector.shape_cast %92 : vector<1x1x128xf32> to vector<1x128xf32>
    %c1_i32_35 = arith.constant 1 : i32
    %94 = tpu.dynamic_rotate %93 by %c1_i32_35 dim 1 : vector<1x128xf32>, i32 -> vector<1x128xf32>
    %95 = vector.shape_cast %94 : vector<1x128xf32> to vector<1x128xf32>
    %96 = vector.broadcast %95 : vector<1x128xf32> to vector<8x128xf32>
    %97 = arith.select %77, %96, %91 : vector<8x128xi1>, vector<8x128xf32>
    %98 = arith.select %75, %97, %90 : vector<8x128xi1>, vector<8x128xf32>
    %99 = arith.subf %89, %98 : vector<8x128xf32>
    %100 = arith.mulf %99, %99 : vector<8x128xf32>
    %c1_36 = arith.constant 1 : index
    %c0_37 = arith.constant 0 : index
    %c0_38 = arith.constant 0 : index
    %101 = vector.load %arg5[%c1_36, %c0_37, %c0_38] : memref<3x8x128xf32, #tpu.memory_space<vmem>>, vector<1x8x128xf32>
    %102 = vector.shape_cast %101 : vector<1x8x128xf32> to vector<8x128xf32>
    %c1_i32_39 = arith.constant 1 : i32
    %103 = tpu.dynamic_rotate %102 by %c1_i32_39 dim 1 : vector<8x128xf32>, i32 -> vector<8x128xf32>
    %c1_i32_40 = arith.constant 1 : i32
    %104 = tpu.dynamic_rotate %103 by %c1_i32_40 dim 0 : vector<8x128xf32>, i32 -> vector<8x128xf32>
    %c2 = arith.constant 2 : index
    %c0_41 = arith.constant 0 : index
    %c0_42 = arith.constant 0 : index
    %105 = vector.load %arg8[%c2, %c0_41, %c0_42] : memref<4x1x128xf32, #tpu.memory_space<vmem>>, vector<1x1x128xf32>
    %106 = vector.shape_cast %105 : vector<1x1x128xf32> to vector<1x128xf32>
    %c1_i32_43 = arith.constant 1 : i32
    %107 = tpu.dynamic_rotate %106 by %c1_i32_43 dim 1 : vector<1x128xf32>, i32 -> vector<1x128xf32>
    %108 = vector.shape_cast %107 : vector<1x128xf32> to vector<1x128xf32>
    %109 = vector.broadcast %108 : vector<1x128xf32> to vector<8x128xf32>
    %110 = arith.select %77, %109, %104 : vector<8x128xi1>, vector<8x128xf32>
    %111 = arith.select %75, %110, %103 : vector<8x128xi1>, vector<8x128xf32>
    %112 = arith.subf %102, %111 : vector<8x128xf32>
    %113 = arith.mulf %112, %112 : vector<8x128xf32>
    %114 = arith.addf %100, %113 : vector<8x128xf32>
    %c2_44 = arith.constant 2 : index
    %c0_45 = arith.constant 0 : index
    %c0_46 = arith.constant 0 : index
    %115 = vector.load %arg5[%c2_44, %c0_45, %c0_46] : memref<3x8x128xf32, #tpu.memory_space<vmem>>, vector<1x8x128xf32>
    %116 = vector.shape_cast %115 : vector<1x8x128xf32> to vector<8x128xf32>
    %c1_i32_47 = arith.constant 1 : i32
    %117 = tpu.dynamic_rotate %116 by %c1_i32_47 dim 1 : vector<8x128xf32>, i32 -> vector<8x128xf32>
    %c1_i32_48 = arith.constant 1 : i32
    %118 = tpu.dynamic_rotate %117 by %c1_i32_48 dim 0 : vector<8x128xf32>, i32 -> vector<8x128xf32>
    %c3 = arith.constant 3 : index
    %c0_49 = arith.constant 0 : index
    %c0_50 = arith.constant 0 : index
    %119 = vector.load %arg8[%c3, %c0_49, %c0_50] : memref<4x1x128xf32, #tpu.memory_space<vmem>>, vector<1x1x128xf32>
    %120 = vector.shape_cast %119 : vector<1x1x128xf32> to vector<1x128xf32>
    %c1_i32_51 = arith.constant 1 : i32
    %121 = tpu.dynamic_rotate %120 by %c1_i32_51 dim 1 : vector<1x128xf32>, i32 -> vector<1x128xf32>
    %122 = vector.shape_cast %121 : vector<1x128xf32> to vector<1x128xf32>
    %123 = vector.broadcast %122 : vector<1x128xf32> to vector<8x128xf32>
    %124 = arith.select %77, %123, %118 : vector<8x128xi1>, vector<8x128xf32>
    %125 = arith.select %75, %124, %117 : vector<8x128xi1>, vector<8x128xf32>
    %126 = arith.subf %116, %125 : vector<8x128xf32>
    %127 = arith.mulf %126, %126 : vector<8x128xf32>
    %128 = arith.addf %114, %127 : vector<8x128xf32>
    %129 = math.rsqrt %128 : vector<8x128xf32>
    %130 = arith.mulf %87, %129 : vector<8x128xf32>
    %cst_52 = arith.constant 0.000000e+00 : f32
    %131 = vector.broadcast %cst_52 : f32 to vector<8x128xf32>
    %132 = arith.cmpf ogt, %130, %131 : vector<8x128xf32>
    %cst_53 = arith.constant 1.000000e+00 : f32
    %133 = vector.broadcast %cst_53 : f32 to vector<8x128xf32>
    %134 = arith.addf %130, %133 : vector<8x128xf32>
    %135 = math.absf %134 : vector<8x128xf32>
    %cst_54 = arith.constant 1.000000e+00 : f32
    %136 = vector.broadcast %cst_54 : f32 to vector<8x128xf32>
    %137 = arith.select %132, %136, %135 : vector<8x128xi1>, vector<8x128xf32>
    %c0_i32_55 = arith.constant 0 : i32
    %138 = arith.cmpi sgt, %arg0, %c0_i32_55 : i32
    %c0_i32_56 = arith.constant 0 : i32
    %139 = arith.cmpi eq, %arg1, %c0_i32_56 : i32
    %140 = arith.andi %138, %139 : i1
    %141 = arith.andi %77, %75 : vector<8x128xi1>
    %142 = vector.broadcast %140 : i1 to vector<8x128xi1>
    %143 = arith.andi %142, %141 : vector<8x128xi1>
    %c1_i32_57 = arith.constant 1 : i32
    %144 = vector.broadcast %c1_i32_57 : i32 to vector<8x128xi32>
    %145 = arith.cmpi sge, %12, %144 : vector<8x128xi32>
    %146 = arith.andi %145, %14 : vector<8x128xi1>
    %cst_58 = arith.constant dense<true> : vector<8x128xi1>
    %147 = arith.xori %143, %cst_58 : vector<8x128xi1>
    %148 = arith.andi %146, %147 : vector<8x128xi1>
    %cst_59 = arith.constant 0.000000e+00 : f32
    %149 = vector.broadcast %cst_59 : f32 to vector<8x128xf32>
    %150 = arith.select %148, %137, %149 : vector<8x128xi1>, vector<8x128xf32>
    %151 = vector.extract_strided_slice %15 {offsets = [7, 0], sizes = [1, 128], strides = [1, 1]} : vector<8x128xf32> to vector<1x128xf32>
    %c0_60 = arith.constant 0 : index
    %c0_61 = arith.constant 0 : index
    %c0_62 = arith.constant 0 : index
    %152 = vector.load %arg8[%c0_60, %c0_61, %c0_62] : memref<4x1x128xf32, #tpu.memory_space<vmem>>, vector<1x1x128xf32>
    %153 = vector.shape_cast %152 : vector<1x1x128xf32> to vector<1x128xf32>
    %154 = vector.shape_cast %151 : vector<1x128xf32> to vector<1x1x128xf32>
    tpu.vector_store %arg8[%c0_60, %c0_61, %c0_62], %154 {strides = array<i32>} : memref<4x1x128xf32, #tpu.memory_space<vmem>>, vector<1x1x128xf32>,
    %c0_63 = arith.constant 0 : index
    %c7 = arith.constant 7 : index
    %c0_64 = arith.constant 0 : index
    %155 = vector.load %arg5[%c0_63, %c7, %c0_64] : memref<3x8x128xf32, #tpu.memory_space<vmem>>, vector<1x1x128xf32>
    %156 = vector.shape_cast %155 : vector<1x1x128xf32> to vector<1x128xf32>
    %c1_65 = arith.constant 1 : index
    %c0_66 = arith.constant 0 : index
    %c0_67 = arith.constant 0 : index
    %157 = vector.load %arg8[%c1_65, %c0_66, %c0_67] : memref<4x1x128xf32, #tpu.memory_space<vmem>>, vector<1x1x128xf32>
    %158 = vector.shape_cast %157 : vector<1x1x128xf32> to vector<1x128xf32>
    %159 = vector.shape_cast %156 : vector<1x128xf32> to vector<1x1x128xf32>
    tpu.vector_store %arg8[%c1_65, %c0_66, %c0_67], %159 {strides = array<i32>} : memref<4x1x128xf32, #tpu.memory_space<vmem>>, vector<1x1x128xf32>,
    %c1_68 = arith.constant 1 : index
    %c7_69 = arith.constant 7 : index
    %c0_70 = arith.constant 0 : index
    %160 = vector.load %arg5[%c1_68, %c7_69, %c0_70] : memref<3x8x128xf32, #tpu.memory_space<vmem>>, vector<1x1x128xf32>
    %161 = vector.shape_cast %160 : vector<1x1x128xf32> to vector<1x128xf32>
    %c2_71 = arith.constant 2 : index
    %c0_72 = arith.constant 0 : index
    %c0_73 = arith.constant 0 : index
    %162 = vector.load %arg8[%c2_71, %c0_72, %c0_73] : memref<4x1x128xf32, #tpu.memory_space<vmem>>, vector<1x1x128xf32>
    %163 = vector.shape_cast %162 : vector<1x1x128xf32> to vector<1x128xf32>
    %164 = vector.shape_cast %161 : vector<1x128xf32> to vector<1x1x128xf32>
    tpu.vector_store %arg8[%c2_71, %c0_72, %c0_73], %164 {strides = array<i32>} : memref<4x1x128xf32, #tpu.memory_space<vmem>>, vector<1x1x128xf32>,
    %c2_74 = arith.constant 2 : index
    %c7_75 = arith.constant 7 : index
    %c0_76 = arith.constant 0 : index
    %165 = vector.load %arg5[%c2_74, %c7_75, %c0_76] : memref<3x8x128xf32, #tpu.memory_space<vmem>>, vector<1x1x128xf32>
    %166 = vector.shape_cast %165 : vector<1x1x128xf32> to vector<1x128xf32>
    %c3_77 = arith.constant 3 : index
    %c0_78 = arith.constant 0 : index
    %c0_79 = arith.constant 0 : index
    %167 = vector.load %arg8[%c3_77, %c0_78, %c0_79] : memref<4x1x128xf32, #tpu.memory_space<vmem>>, vector<1x1x128xf32>
    %168 = vector.shape_cast %167 : vector<1x1x128xf32> to vector<1x128xf32>
    %169 = vector.shape_cast %166 : vector<1x128xf32> to vector<1x1x128xf32>
    tpu.vector_store %arg8[%c3_77, %c0_78, %c0_79], %169 {strides = array<i32>} : memref<4x1x128xf32, #tpu.memory_space<vmem>>, vector<1x1x128xf32>,
    %c0_80 = arith.constant 0 : index
    %c0_81 = arith.constant 0 : index
    %c0_82 = arith.constant 0 : index
    %170 = vector.load %arg7[%c0_80, %c0_81, %c0_82] : memref<3x8x128xf32, #tpu.memory_space<vmem>>, vector<1x8x128xf32>
    %171 = vector.shape_cast %170 : vector<1x8x128xf32> to vector<8x128xf32>
    %172 = arith.addf %171, %67 : vector<8x128xf32>
    %c0_83 = arith.constant 0 : index
    %c0_84 = arith.constant 0 : index
    %c0_85 = arith.constant 0 : index
    %173 = vector.load %arg7[%c0_83, %c0_84, %c0_85] : memref<3x8x128xf32, #tpu.memory_space<vmem>>, vector<1x8x128xf32>
    %174 = vector.shape_cast %173 : vector<1x8x128xf32> to vector<8x128xf32>
    %175 = vector.shape_cast %172 : vector<8x128xf32> to vector<1x8x128xf32>
    tpu.vector_store %arg7[%c0_83, %c0_84, %c0_85], %175 {strides = array<i32>} : memref<3x8x128xf32, #tpu.memory_space<vmem>>, vector<1x8x128xf32>,
    %c1_86 = arith.constant 1 : index
    %c0_87 = arith.constant 0 : index
    %c0_88 = arith.constant 0 : index
    %176 = vector.load %arg7[%c1_86, %c0_87, %c0_88] : memref<3x8x128xf32, #tpu.memory_space<vmem>>, vector<1x8x128xf32>
    %177 = vector.shape_cast %176 : vector<1x8x128xf32> to vector<8x128xf32>
    %178 = arith.addf %177, %73 : vector<8x128xf32>
    %c1_89 = arith.constant 1 : index
    %c0_90 = arith.constant 0 : index
    %c0_91 = arith.constant 0 : index
    %179 = vector.load %arg7[%c1_89, %c0_90, %c0_91] : memref<3x8x128xf32, #tpu.memory_space<vmem>>, vector<1x8x128xf32>
    %180 = vector.shape_cast %179 : vector<1x8x128xf32> to vector<8x128xf32>
    %181 = vector.shape_cast %178 : vector<8x128xf32> to vector<1x8x128xf32>
    tpu.vector_store %arg7[%c1_89, %c0_90, %c0_91], %181 {strides = array<i32>} : memref<3x8x128xf32, #tpu.memory_space<vmem>>, vector<1x8x128xf32>,
    %c2_92 = arith.constant 2 : index
    %c0_93 = arith.constant 0 : index
    %c0_94 = arith.constant 0 : index
    %182 = vector.load %arg7[%c2_92, %c0_93, %c0_94] : memref<3x8x128xf32, #tpu.memory_space<vmem>>, vector<1x8x128xf32>
    %183 = vector.shape_cast %182 : vector<1x8x128xf32> to vector<8x128xf32>
    %184 = arith.addf %183, %150 : vector<8x128xf32>
    %c2_95 = arith.constant 2 : index
    %c0_96 = arith.constant 0 : index
    %c0_97 = arith.constant 0 : index
    %185 = vector.load %arg7[%c2_95, %c0_96, %c0_97] : memref<3x8x128xf32, #tpu.memory_space<vmem>>, vector<1x8x128xf32>
    %186 = vector.shape_cast %185 : vector<1x8x128xf32> to vector<8x128xf32>
    %187 = vector.shape_cast %184 : vector<8x128xf32> to vector<1x8x128xf32>
    tpu.vector_store %arg7[%c2_95, %c0_96, %c0_97], %187 {strides = array<i32>} : memref<3x8x128xf32, #tpu.memory_space<vmem>>, vector<1x8x128xf32>,
    %c0_i32_98 = arith.constant 0 : i32
    %188 = arith.cmpi eq, %arg1, %c0_i32_98 : i32
    %189 = arith.extui %188 : i1 to i32
    %c0_i32_99 = arith.constant 0 : i32
    %190 = arith.cmpi ne, %189, %c0_i32_99 : i32
    scf.if %190 {
      %c0_100 = arith.constant 0 : index
      %c0_101 = arith.constant 0 : index
      %c0_102 = arith.constant 0 : index
      %191 = vector.load %arg7[%c0_100, %c0_101, %c0_102] : memref<3x8x128xf32, #tpu.memory_space<vmem>>, vector<1x8x128xf32>
      %192 = vector.shape_cast %191 : vector<1x8x128xf32> to vector<8x128xf32>
      %193 = vector.shape_cast %192 : vector<8x128xf32> to vector<1x8x128xf32>
      %cst_103 = arith.constant dense<0.000000e+00> : vector<1xf32>
      %194 = vector.multi_reduction <add>, %193, %cst_103 [1, 2] : vector<1x8x128xf32> to vector<1xf32>
      %195 = vector.shape_cast %194 : vector<1xf32> to vector<1x1x1xf32>
      %196 = vector.extract %195[0, 0, 0] : f32 from vector<1x1x1xf32>
      %c1_104 = arith.constant 1 : index
      %c0_105 = arith.constant 0 : index
      %c0_106 = arith.constant 0 : index
      %197 = vector.load %arg7[%c1_104, %c0_105, %c0_106] : memref<3x8x128xf32, #tpu.memory_space<vmem>>, vector<1x8x128xf32>
      %198 = vector.shape_cast %197 : vector<1x8x128xf32> to vector<8x128xf32>
      %199 = vector.shape_cast %198 : vector<8x128xf32> to vector<1x8x128xf32>
      %cst_107 = arith.constant dense<0.000000e+00> : vector<1xf32>
      %200 = vector.multi_reduction <add>, %199, %cst_107 [1, 2] : vector<1x8x128xf32> to vector<1xf32>
      %201 = vector.shape_cast %200 : vector<1xf32> to vector<1x1x1xf32>
      %202 = vector.extract %201[0, 0, 0] : f32 from vector<1x1x1xf32>
      %c2_108 = arith.constant 2 : index
      %c0_109 = arith.constant 0 : index
      %c0_110 = arith.constant 0 : index
      %203 = vector.load %arg7[%c2_108, %c0_109, %c0_110] : memref<3x8x128xf32, #tpu.memory_space<vmem>>, vector<1x8x128xf32>
      %204 = vector.shape_cast %203 : vector<1x8x128xf32> to vector<8x128xf32>
      %205 = vector.shape_cast %204 : vector<8x128xf32> to vector<1x8x128xf32>
      %cst_111 = arith.constant dense<0.000000e+00> : vector<1xf32>
      %206 = vector.multi_reduction <add>, %205, %cst_111 [1, 2] : vector<1x8x128xf32> to vector<1xf32>
      %207 = vector.shape_cast %206 : vector<1xf32> to vector<1x1x1xf32>
      %208 = vector.extract %207[0, 0, 0] : f32 from vector<1x1x1xf32>
      %209 = tpu.iota {dimensions = array<i32: 0>} : vector<8x128xi32>
      %210 = tpu.iota {dimensions = array<i32: 1>} : vector<8x128xi32>
      %c0_i32_112 = arith.constant 0 : i32
      %211 = vector.broadcast %c0_i32_112 : i32 to vector<8x128xi32>
      %212 = arith.cmpi eq, %209, %211 : vector<8x128xi32>
      %c0_i32_113 = arith.constant 0 : i32
      %213 = vector.broadcast %c0_i32_113 : i32 to vector<8x128xi32>
      %214 = arith.cmpi eq, %210, %213 : vector<8x128xi32>
      %215 = arith.andi %212, %214 : vector<8x128xi1>
      %c1_i32_114 = arith.constant 1 : i32
      %216 = vector.broadcast %c1_i32_114 : i32 to vector<8x128xi32>
      %217 = arith.cmpi eq, %210, %216 : vector<8x128xi32>
      %218 = arith.andi %212, %217 : vector<8x128xi1>
      %c2_i32_115 = arith.constant 2 : i32
      %219 = vector.broadcast %c2_i32_115 : i32 to vector<8x128xi32>
      %220 = arith.cmpi eq, %210, %219 : vector<8x128xi32>
      %221 = arith.andi %212, %220 : vector<8x128xi1>
      %cst_116 = arith.constant 0.000000e+00 : f32
      %222 = vector.broadcast %208 : f32 to vector<8x128xf32>
      %223 = vector.broadcast %cst_116 : f32 to vector<8x128xf32>
      %224 = arith.select %221, %222, %223 : vector<8x128xi1>, vector<8x128xf32>
      %225 = vector.broadcast %202 : f32 to vector<8x128xf32>
      %226 = arith.select %218, %225, %224 : vector<8x128xi1>, vector<8x128xf32>
      %227 = vector.broadcast %196 : f32 to vector<8x128xf32>
      %228 = arith.select %215, %227, %226 : vector<8x128xi1>, vector<8x128xf32>
      %c0_117 = arith.constant 0 : index
      %c0_118 = arith.constant 0 : index
      %c0_119 = arith.constant 0 : index
      %229 = vector.load %arg6[%c0_117, %c0_118, %c0_119] : memref<1x8x128xf32, #tpu.memory_space<vmem>>, vector<1x8x128xf32>
      %230 = vector.shape_cast %229 : vector<1x8x128xf32> to vector<8x128xf32>
      %231 = vector.shape_cast %228 : vector<8x128xf32> to vector<1x8x128xf32>
      tpu.vector_store %arg6[%c0_117, %c0_118, %c0_119], %231 {strides = array<i32>} : memref<1x8x128xf32, #tpu.memory_space<vmem>>, vector<1x8x128xf32>,
    } else {
    }
    return
  }
  func.func @transform_0(%arg0: i32, %arg1: i32) -> (i32, i32) {
    %c1_i32 = arith.constant 1 : i32
    %0 = arith.muli %arg0, %c1_i32 : i32
    %1 = arith.addi %0, %arg1 : i32
    %c0_i32 = arith.constant 0 : i32
    %2 = arith.minsi %1, %c0_i32 : i32
    %c0_i32_0 = arith.constant 0 : i32
    %c0_i32_1 = arith.constant 0 : i32
    return %2, %c0_i32_0 : i32, i32
  }
  func.func @transform_1(%arg0: i32, %arg1: i32) -> (i32, i32, i32) {
    %c1_i32 = arith.constant 1 : i32
    %0 = arith.muli %arg0, %c1_i32 : i32
    %1 = arith.addi %0, %arg1 : i32
    %c0_i32 = arith.constant 0 : i32
    %2 = arith.minsi %1, %c0_i32 : i32
    %c0_i32_0 = arith.constant 0 : i32
    %c0_i32_1 = arith.constant 0 : i32
    %c0_i32_2 = arith.constant 0 : i32
    return %c0_i32_0, %2, %c0_i32_1 : i32, i32, i32
  }
  func.func @transform_2(%arg0: i32, %arg1: i32) -> (i32, i32) {
    %c1_i32 = arith.constant 1 : i32
    %0 = arith.muli %arg0, %c1_i32 : i32
    %1 = arith.addi %0, %arg1 : i32
    %c0_i32 = arith.constant 0 : i32
    %2 = arith.minsi %1, %c0_i32 : i32
    %c0_i32_0 = arith.constant 0 : i32
    %c0_i32_1 = arith.constant 0 : i32
    return %2, %c0_i32_0 : i32, i32
  }
  func.func @transform_3(%arg0: i32, %arg1: i32) -> (i32, i32, i32) {
    %c1_i32 = arith.constant 1 : i32
    %0 = arith.muli %arg0, %c1_i32 : i32
    %1 = arith.addi %0, %arg1 : i32
    %c0_i32 = arith.constant 0 : i32
    %2 = arith.minsi %1, %c0_i32 : i32
    %c0_i32_0 = arith.constant 0 : i32
    %c0_i32_1 = arith.constant 0 : i32
    %c0_i32_2 = arith.constant 0 : i32
    return %c0_i32_0, %2, %c0_i32_1 : i32, i32, i32
  }
  func.func @transform_4(%arg0: i32, %arg1: i32) -> (i32, i32, i32) {
    %c0_i32 = arith.constant 0 : i32
    %c0_i32_0 = arith.constant 0 : i32
    %c0_i32_1 = arith.constant 0 : i32
    return %arg0, %c0_i32, %c0_i32_0 : i32, i32, i32
  }
}

</mosaic_0001>

<llo_original>
// kernel: ray_model_forward.1
$region0: #{ray_model_forward.1}
  #allocation0 [shape = 'u32[]', space=smem, size = 0x4, offset = 0x4, fixed_abs, tag = 'smem constant byte address 0x4 - core index']
  #allocation1 [shape = 'u32[144,128]{1,0:T(1,128)}', space=vmem, size = 0x12000, scoped, tag = 'internal scratch']
  #allocation2 [shape = 'f32[3,8,128]{2,1,0:T(8,128)}', space=vmem, size = 0x3000, scoped, tag = 'scratch operand']
  #allocation3 [shape = 'f32[4,1,128]{2,1,0:T(1,128)}', space=vmem, size = 0x800, scoped, tag = 'scratch operand']
  %s0 = inlined_call_operand.vmem [shape: f32[8,128], index: 0, kind: input, shape index: {}]
  %s1 = inlined_call_operand.vmem [shape: f32[2,8,128], index: 1, kind: input, shape index: {}]
  %s2 = inlined_call_operand.vmem [shape: s32[8,128], index: 2, kind: input, shape index: {}]
  %s3 = inlined_call_operand.vmem [shape: f32[3,8,128], index: 3, kind: input, shape index: {}]
  %s4 = inlined_call_operand.vmem [shape: f32[2,8,128], index: 4, kind: output, shape index: {}]
  %s5 = sld [smem:[#allocation0]]
  $region57: #{ray_model_forward.1} parent=0
    _
  %s7 = ssub.s32 1, %s5
  %s8 = scalar_select 0, %s7, %s5
  loop: start=0, step=1, limit=4
  $region2: #{ray_model_forward.1} parent=0 // loop_pre_header
    _
  $region3: #{ray_model_forward.1} parent=0 // loop_header
    %s10 = sphi 0, %s14
    %p11 = scmp.ge.s32.totalorder %s10, 4
    %s17 = sphi 0, %s29
    %s18 = sphi 0, %s25
    %s19 = sphi 0, %s17
    %s20 = sphi 0, %s18
    %s21 = sphi 0, %s19
    %s22 = sphi 0, %s20
    %s38 = sphi 0, %s40
    %s41 = sphi 0, %s38
    %s42 = sphi 0, %s41
    %s58 = sphi 0, %s42
    %s70 = sphi 0, %s72
    %s73 = sphi 0, %s70
    %s74 = sphi 0, %s73
    %s90 = sphi 0, %s74
    %s102 = sphi 0, %s104
    %s105 = sphi 0, %s102
    %s106 = sphi 0, %s105
    %s122 = sphi 0, %s106
    %s134 = sphi 0, %s136
    %s137 = sphi 0, %s134
    %s138 = sphi 0, %s137
    %s154 = sphi 0, %s138
    %s160 = sphi 0, %s162
    %s163 = sphi 0, %s160
    %s164 = sphi 0, %s163
    %s180 = sphi 0, %s164
  $region4: #{ray_model_forward.1} parent=0 // loop_header_branch
    %13 = sbr.rel (%p11) target = $region8
  $region5: #{ray_model_forward.1} parent=0 // loop_body
    %s15 = ssub.s32 %s10, 1
    %s16 = ssub.s32 %s10, 2
    %s23 = sadd.s32 1, %s18
    %p24 = scmp.ge.s32.totalorder %s23, 1
    %s25 = scalar_select %p24, 0, %s23
    %s26 = sadd.s32 1, %s17
    %s27 = scalar_select %p24, %s26, %s17
    %p28 = scmp.ge.s32.totalorder %s27, 2
    %s29 = scalar_select %p28, 0, %s27
    %s30 = sadd.s32 %s17, %s18
    %p31 = scmp.lt.s32.totalorder %s30, 0
    %s32 = scalar_select %p31, %s30, 0
    %s33 = sadd.s32 %s29, %s25
    %p34 = scmp.lt.s32.totalorder %s33, 0
    %s35 = scalar_select %p34, %s33, 0
    %s36 = ssub.s32 %s32, %s35
    %p37 = scmp.eq.s32.totalorder %s36, 0
    %s39 = sadd.s32 %s38, 1
    %s40 = scalar_select %p37, %s38, %s39
    %p43 = pneg %p37
    %p44 = scmp.eq.s32.totalorder %s10, 1
    %p45 = por %p43, %p44
    %p46 = scmp.ne.s32.totalorder %s38, %s41
    %p47 = scmp.eq.s32.totalorder %s10, 0
    %p48 = por %p46, %p47
    %p49 = scmp.ne.s32.totalorder %s38, %s41
    %p50 = scmp.eq.s32.totalorder %s15, 1
    %p51 = por %p49, %p50
    %p52 = scmp.ne.s32.totalorder %s41, %s42
    %p53 = scmp.eq.s32.totalorder %s15, 0
    %p54 = por %p52, %p53
    %p55 = scmp.ne.s32.totalorder %s41, %s42
    %p56 = scmp.eq.s32.totalorder %s16, 1
    %p57 = por %p55, %p56
    %p59 = scmp.ne.s32.totalorder %s42, %s58
    %p60 = scmp.eq.s32.totalorder %s16, 0
    %p61 = por %p59, %p60
    %s62 = sadd.s32 %s17, %s18
    %p63 = scmp.lt.s32.totalorder %s62, 0
    %s64 = scalar_select %p63, %s62, 0
    %s65 = sadd.s32 %s29, %s25
    %p66 = scmp.lt.s32.totalorder %s65, 0
    %s67 = scalar_select %p66, %s65, 0
    %s68 = ssub.s32 %s64, %s67
    %p69 = scmp.eq.s32.totalorder %s68, 0
    %s71 = sadd.s32 %s70, 1
    %s72 = scalar_select %p69, %s70, %s71
    %p75 = pneg %p69
    %p76 = scmp.eq.s32.totalorder %s10, 1
    %p77 = por %p75, %p76
    %p78 = scmp.ne.s32.totalorder %s70, %s73
    %p79 = scmp.eq.s32.totalorder %s10, 0
    %p80 = por %p78, %p79
    %p81 = scmp.ne.s32.totalorder %s70, %s73
    %p82 = scmp.eq.s32.totalorder %s15, 1
    %p83 = por %p81, %p82
    %p84 = scmp.ne.s32.totalorder %s73, %s74
    %p85 = scmp.eq.s32.totalorder %s15, 0
    %p86 = por %p84, %p85
    %p87 = scmp.ne.s32.totalorder %s73, %s74
    %p88 = scmp.eq.s32.totalorder %s16, 1
    %p89 = por %p87, %p88
    %p91 = scmp.ne.s32.totalorder %s74, %s90
    %p92 = scmp.eq.s32.totalorder %s16, 0
    %p93 = por %p91, %p92
    %s94 = sadd.s32 %s17, %s18
    %p95 = scmp.lt.s32.totalorder %s94, 0
    %s96 = scalar_select %p95, %s94, 0
    %s97 = sadd.s32 %s29, %s25
    %p98 = scmp.lt.s32.totalorder %s97, 0
    %s99 = scalar_select %p98, %s97, 0
    %s100 = ssub.s32 %s96, %s99
    %p101 = scmp.eq.s32.totalorder %s100, 0
    %s103 = sadd.s32 %s102, 1
    %s104 = scalar_select %p101, %s102, %s103
    %p107 = pneg %p101
    %p108 = scmp.eq.s32.totalorder %s10, 1
    %p109 = por %p107, %p108
    %p110 = scmp.ne.s32.totalorder %s102, %s105
    %p111 = scmp.eq.s32.totalorder %s10, 0
    %p112 = por %p110, %p111
    %p113 = scmp.ne.s32.totalorder %s102, %s105
    %p114 = scmp.eq.s32.totalorder %s15, 1
    %p115 = por %p113, %p114
    %p116 = scmp.ne.s32.totalorder %s105, %s106
    %p117 = scmp.eq.s32.totalorder %s15, 0
    %p118 = por %p116, %p117
    %p119 = scmp.ne.s32.totalorder %s105, %s106
    %p120 = scmp.eq.s32.totalorder %s16, 1
    %p121 = por %p119, %p120
    %p123 = scmp.ne.s32.totalorder %s106, %s122
    %p124 = scmp.eq.s32.totalorder %s16, 0
    %p125 = por %p123, %p124
    %s126 = sadd.s32 %s17, %s18
    %p127 = scmp.lt.s32.totalorder %s126, 0
    %s128 = scalar_select %p127, %s126, 0
    %s129 = sadd.s32 %s29, %s25
    %p130 = scmp.lt.s32.totalorder %s129, 0
    %s131 = scalar_select %p130, %s129, 0
    %s132 = ssub.s32 %s128, %s131
    %p133 = scmp.eq.s32.totalorder %s132, 0
    %s135 = sadd.s32 %s134, 1
    %s136 = scalar_select %p133, %s134, %s135
    %p139 = pneg %p133
    %p140 = scmp.eq.s32.totalorder %s10, 1
    %p141 = por %p139, %p140
    %p142 = scmp.ne.s32.totalorder %s134, %s137
    %p143 = scmp.eq.s32.totalorder %s10, 0
    %p144 = por %p142, %p143
    %p145 = scmp.ne.s32.totalorder %s134, %s137
    %p146 = scmp.eq.s32.totalorder %s15, 1
    %p147 = por %p145, %p146
    %p148 = scmp.ne.s32.totalorder %s137, %s138
    %p149 = scmp.eq.s32.totalorder %s15, 0
    %p150 = por %p148, %p149
    %p151 = scmp.ne.s32.totalorder %s137, %s138
    %p152 = scmp.eq.s32.totalorder %s16, 1
    %p153 = por %p151, %p152
    %p155 = scmp.ne.s32.totalorder %s138, %s154
    %p156 = scmp.eq.s32.totalorder %s16, 0
    %p157 = por %p155, %p156
    %s158 = ssub.s32 %s17, %s29
    %p159 = scmp.eq.s32.totalorder %s158, 0
    %s161 = sadd.s32 %s160, 1
    %s162 = scalar_select %p159, %s160, %s161
    %p165 = pneg %p159
    %p166 = scmp.eq.s32.totalorder %s10, 1
    %p167 = por %p165, %p166
    %p168 = scmp.ne.s32.totalorder %s160, %s163
    %p169 = scmp.eq.s32.totalorder %s10, 0
    %p170 = por %p168, %p169
    %p171 = scmp.ne.s32.totalorder %s160, %s163
    %p172 = scmp.eq.s32.totalorder %s15, 1
    %p173 = por %p171, %p172
    %p174 = scmp.ne.s32.totalorder %s163, %s164
    %p175 = scmp.eq.s32.totalorder %s15, 0
    %p176 = por %p174, %p175
    %p177 = scmp.ne.s32.totalorder %s163, %s164
    %p178 = scmp.eq.s32.totalorder %s16, 1
    %p179 = por %p177, %p178
    %p181 = scmp.ne.s32.totalorder %s164, %s180
    %p182 = scmp.eq.s32.totalorder %s16, 0
    %p183 = por %p181, %p182
    %p184 = scmp.le.s32.totalorder 1, %s10
    %p185 = scmp.lt.s32.totalorder %s10, 3
    %p186 = pnand %p184, %p185
    %p187 = pneg %p186
    // Predicated region
    $region9: #{ray_model_forward.1} parent=5 // pred_check
      _
    $region10: #{ray_model_forward.1} parent=5 // pred_check_branch
      %189 = sbr.rel (%p186) target = $region12
    $region11: #{ray_model_forward.1} parent=5 // pred_region
      %s190 = ssub.s32 %s10, 1
    $region12: #{ray_model_forward.1} parent=5 // pred_fallthru
      _
    %p191 = scmp.lt.s32.totalorder %s10, 2
    // Predicated region
    $region13: #{ray_model_forward.1} parent=5 // pred_check
      %p192 = pneg %p191
    $region14: #{ray_model_forward.1} parent=5 // pred_check_branch
      %194 = sbr.rel (%p192) target = $region16
    $region15: #{ray_model_forward.1} parent=5 // pred_region
      // Predicated region
      $region17: #{ray_model_forward.1} parent=15 // pred_check
        %p195 = pneg %p48
      $region18: #{ray_model_forward.1} parent=15 // pred_check_branch
        %197 = sbr.rel (%p195) target = $region20
      $region19: #{ray_model_forward.1} parent=15 // pred_region
        %s198 = sadd.s32 %s17, %s18
        %p199 = scmp.lt.s32.totalorder %s198, 0
        %s200 = scalar_select %p199, %s198, 0
        %p201 = scmp.lt.s32.totalorder %s200, 0
        %s202 = scalar_select %p201, %s200, 0
        %s203 = smul.addr %s202, 8
        %s204 = scalar_lea.vmem %s0, %s203
        %s205 = sadd.s32 %s17, %s18
        %p206 = scmp.lt.s32.totalorder %s205, 0
        %s207 = scalar_select %p206, %s205, 0
      $region20: #{ray_model_forward.1} parent=15 // pred_fallthru
        _
      // Predicated region
      $region21: #{ray_model_forward.1} parent=15 // pred_check
        %p208 = pneg %p80
      $region22: #{ray_model_forward.1} parent=15 // pred_check_branch
        %210 = sbr.rel (%p208) target = $region24
      $region23: #{ray_model_forward.1} parent=15 // pred_region
        %s211 = sadd.s32 %s17, %s18
        %p212 = scmp.lt.s32.totalorder %s211, 0
        %s213 = scalar_select %p212, %s211, 0
        %p214 = scmp.lt.s32.totalorder %s213, 0
        %s215 = scalar_select %p214, %s213, 0
        %s216 = smul.addr %s215, 8
        %s217 = scalar_lea.vmem %s1, %s216
        %s218 = sadd.s32 %s17, %s18
        %p219 = scmp.lt.s32.totalorder %s218, 0
        %s220 = scalar_select %p219, %s218, 0
      $region24: #{ray_model_forward.1} parent=15 // pred_fallthru
        _
      // Predicated region
      $region25: #{ray_model_forward.1} parent=15 // pred_check
        %p221 = pneg %p112
      $region26: #{ray_model_forward.1} parent=15 // pred_check_branch
        %223 = sbr.rel (%p221) target = $region28
      $region27: #{ray_model_forward.1} parent=15 // pred_region
        %s224 = sadd.s32 %s17, %s18
        %p225 = scmp.lt.s32.totalorder %s224, 0
        %s226 = scalar_select %p225, %s224, 0
        %p227 = scmp.lt.s32.totalorder %s226, 0
        %s228 = scalar_select %p227, %s226, 0
        %s229 = smul.addr %s228, 8
        %s230 = scalar_lea.vmem %s2, %s229
        %s231 = sadd.s32 %s17, %s18
        %p232 = scmp.lt.s32.totalorder %s231, 0
        %s233 = scalar_select %p232, %s231, 0
      $region28: #{ray_model_forward.1} parent=15 // pred_fallthru
        _
      // Predicated region
      $region29: #{ray_model_forward.1} parent=15 // pred_check
        %p234 = pneg %p144
      $region30: #{ray_model_forward.1} parent=15 // pred_check_branch
        %236 = sbr.rel (%p234) target = $region32
      $region31: #{ray_model_forward.1} parent=15 // pred_region
        %s237 = sadd.s32 %s17, %s18
        %p238 = scmp.lt.s32.totalorder %s237, 0
        %s239 = scalar_select %p238, %s237, 0
        %p240 = scmp.lt.s32.totalorder %s239, 0
        %s241 = scalar_select %p240, %s239, 0
        %s242 = smul.addr %s241, 8
        %s243 = scalar_lea.vmem %s3, %s242
        %s244 = sadd.s32 %s17, %s18
        %p245 = scmp.lt.s32.totalorder %s244, 0
        %s246 = scalar_select %p245, %s244, 0
      $region32: #{ray_model_forward.1} parent=15 // pred_fallthru
        _
    $region16: #{ray_model_forward.1} parent=5 // pred_fallthru
      _
    %p247 = scmp.le.s32.totalorder 1, %s10
    %p248 = scmp.lt.s32.totalorder %s10, 3
    %p249 = pnand %p247, %p248
    %p250 = pneg %p249
    // Predicated region
    $region33: #{ray_model_forward.1} parent=5 // pred_check
      _
    $region34: #{ray_model_forward.1} parent=5 // pred_check_branch
      %252 = sbr.rel (%p249) target = $region36
    $region35: #{ray_model_forward.1} parent=5 // pred_region
      %s253 = ssub.s32 %s10, 1
      %s254 = sadd.s32 %s19, %s20
      %p255 = scmp.lt.s32.totalorder %s254, 0
      %s256 = scalar_select %p255, %s254, 0
      %p257 = scmp.lt.s32.totalorder %s256, 0
      %s258 = scalar_select %p257, %s256, 0
      %s259 = smul.addr %s258, 8
      %s260 = scalar_lea.vmem %s0, %s259
      %p261 = pneg %p54
      %p262 = pneg %p51
      %s263 = sadd.s32 %s19, %s20
      %p264 = scmp.lt.s32.totalorder %s263, 0
      %s265 = scalar_select %p264, %s263, 0
      %p266 = scmp.lt.s32.totalorder %s265, 0
      %s267 = scalar_select %p266, %s265, 0
      %s268 = smul.addr %s267, 8
      %s269 = scalar_lea.vmem %s1, %s268
      %p270 = pneg %p86
      %p271 = pneg %p83
      %s272 = sadd.s32 %s19, %s20
      %p273 = scmp.lt.s32.totalorder %s272, 0
      %s274 = scalar_select %p273, %s272, 0
      %p275 = scmp.lt.s32.totalorder %s274, 0
      %s276 = scalar_select %p275, %s274, 0
      %s277 = smul.addr %s276, 8
      %s278 = scalar_lea.vmem %s2, %s277
      %p279 = pneg %p118
      %p280 = pneg %p115
      %s281 = sadd.s32 %s19, %s20
      %p282 = scmp.lt.s32.totalorder %s281, 0
      %s283 = scalar_select %p282, %s281, 0
      %p284 = scmp.lt.s32.totalorder %s283, 0
      %s285 = scalar_select %p284, %s283, 0
      %s286 = smul.addr %s285, 8
      %s287 = scalar_lea.vmem %s3, %s286
      %p288 = pneg %p150
      %p289 = pneg %p147
      %p290 = pneg %p176
      %p291 = pneg %p173
      %p292 = scmp.lt.s32.totalorder %s19, 1
      %s293 = scalar_select %p292, %s19, 1
      %s294 = smul.addr %s293, 8
      %s295 = scalar_lea.vmem %s4, %s294
      %s296 = sadd.s32 %s19, %s20
      %p297 = scmp.lt.s32.totalorder %s296, 0
      %s298 = scalar_select %p297, %s296, 0
      %p299 = scmp.lt.s32.totalorder %s298, 0
      %s300 = scalar_select %p299, %s298, 0
      %s301 = smul.addr %s300, 8
      %s302 = scalar_lea.vmem %s0, %s301
      %s303 = sadd.s32 %s19, %s20
      %p304 = scmp.lt.s32.totalorder %s303, 0
      %s305 = scalar_select %p304, %s303, 0
      %s306 = sadd.s32 %s19, %s20
      %p307 = scmp.lt.s32.totalorder %s306, 0
      %s308 = scalar_select %p307, %s306, 0
      %p309 = scmp.lt.s32.totalorder %s308, 0
      %s310 = scalar_select %p309, %s308, 0
      %s311 = smul.addr %s310, 8
      %s312 = scalar_lea.vmem %s1, %s311
      %s313 = sadd.s32 %s19, %s20
      %p314 = scmp.lt.s32.totalorder %s313, 0
      %s315 = scalar_select %p314, %s313, 0
      %s316 = sadd.s32 %s19, %s20
      %p317 = scmp.lt.s32.totalorder %s316, 0
      %s318 = scalar_select %p317, %s316, 0
      %p319 = scmp.lt.s32.totalorder %s318, 0
      %s320 = scalar_select %p319, %s318, 0
      %s321 = smul.addr %s320, 8
      %s322 = scalar_lea.vmem %s2, %s321
      %s323 = sadd.s32 %s19, %s20
      %p324 = scmp.lt.s32.totalorder %s323, 0
      %s325 = scalar_select %p324, %s323, 0
      %s326 = sadd.s32 %s19, %s20
      %p327 = scmp.lt.s32.totalorder %s326, 0
      %s328 = scalar_select %p327, %s326, 0
      %p329 = scmp.lt.s32.totalorder %s328, 0
      %s330 = scalar_select %p329, %s328, 0
      %s331 = smul.addr %s330, 8
      %s332 = scalar_lea.vmem %s3, %s331
      %s333 = sadd.s32 %s19, %s20
      %p334 = scmp.lt.s32.totalorder %s333, 0
      %s335 = scalar_select %p334, %s333, 0
      %p336 = scmp.lt.s32.totalorder %s19, 1
      %s337 = scalar_select %p336, %s19, 1
      %s338 = smul.addr %s337, 8
      %s339 = scalar_lea.vmem %s4, %s338
      %p340 = scmp.eq.s32.totalorder %s20, 0
      // Predicated region
      $region37: #{ray_model_forward.1} parent=35 // pred_check
        %p341 = pneg %p340
      $region38: #{ray_model_forward.1} parent=35 // pred_check_branch
        %343 = sbr.rel (%p341) target = $region40
      $region39: #{ray_model_forward.1} parent=35 // pred_region
        %344 = vst [vmem:[#allocation2] sm:$0xff] 0.0
        %345 = vst [vmem:[#allocation2 + $0x8] sm:$0xff] 0.0
        %346 = vst [vmem:[#allocation2 + $0x10] sm:$0xff] 0.0
        %347 = vst [vmem:[#allocation3] sm:$0x1] 0.0
        %348 = vst [vmem:[#allocation3 + $0x1] sm:$0x1] 0.0
        %349 = vst [vmem:[#allocation3 + $0x2] sm:$0x1] 0.0
        %350 = vst [vmem:[#allocation3 + $0x3] sm:$0x1] 0.0
      $region40: #{ray_model_forward.1} parent=35 // pred_fallthru
        _
      %v351 = vlaneseq
      %v352 = vshrl.u32 %v351, 7
      %v353 = vlaneseq
      %v354 = vand.u32 %v353, 127
      %s355 = sadd.s32 %s19, %s20
      %s356 = smul.u32 %s355, 1024
      %v357 = vmul.u32 %v352, 128
      %v358 = vstv %s356
      %v359 = vadd.s32 %v358, %v357
      %v360 = vadd.s32 %v359, %v354
      %vm361 = vcmp.lt.s32.totalorder %v360, 256
      %v362 = vld [vmem:[%s302] sm:$0xff]
      %v363 = vld [vmem:[%s312] sm:$0xff]
      %s364 = scalar_lea.vmem %s312, 8
      %v365 = vld [vmem:[%s364] sm:$0xff]
      %v366 = vld [vmem:[%s322] sm:$0xff]
      %v367 = vsub.f32 %v362, %v363
      %v368 = vand.u32 2147483647, %v367
      %v369 = vsub.f32 %v362, %v365
      %v370 = vand.u32 2147483647, %v369
      %v371 = vand.u32 2147483647, %v363
      %v372 = vand.u32 2147483647, %v365
      %vm373 = vcmp.lt.f32.partialorder %v371, %v372
      %v374 = vsel %vm373, %v368, %v370
      %v375 = vadd.f32 %v363, %v365
      %v376 = vmul.f32 %v375, 0.5
      %v377 = vsub.f32 %v365, %v363
      %v378 = vmul.f32 %v377, 0.5
      %v379 = vsub.f32 %v362, %v376
      %v380 = vand.u32 2147483647, %v379
      %v381 = vsub.f32 %v378, %v380
      %v382 = vmax.f32 %v381, 0.0
      %v383 = vsub.f32 %v365, %v362
      %v384 = vmax.f32 %v383, 0.0
      %v385 = vmin.f32 %v384, %v368
      %v386 = vsel %vm373, %v368, %v385
      %v387 = vmax.f32 %v367, 0.0
      %v388 = vmin.f32 %v387, %v370
      %v389 = vsel %vm373, %v388, %v370
      %vm390 = vcmp.eq.s32.totalorder %v366, 1
      %vm391 = vcmp.eq.s32.totalorder %v366, 2
      %vm392 = vcmp.eq.s32.totalorder %v366, 3
      %vm393 = vcmp.eq.s32.totalorder %v366, 4
      %vm394 = vcmp.eq.s32.totalorder %v366, 5
      %v395 = vsel %vm394, %v370, 0.0
      %v396 = vsel %vm393, %v389, %v395
      %v397 = vsel %vm392, %v386, %v396
      %v398 = vsel %vm391, %v382, %v397
      %v399 = vsel %vm390, %v374, %v398
      %v400 = vsel %vm361, %v399, 0.0
      %vm401 = vcmp.gt.s32.totalorder %v366, 0
      %vm402 = vmand %vm361, %vm401
      %v403 = vsel %vm402, 1.0, 0.0
      %vm404 = vcmp.eq.s32.totalorder %v354, 0
      %vm405 = vcmp.eq.s32.totalorder %v352, 0
      %406 = vrot.lane.b32.xlu0 %v362, 1
      %v407 = vpop.permute.xlu0 %406
      %v408 = vrot.slane %v407, 7
      %v409 = vld [vmem:[#allocation3] sm:$0x1]
      %410 = vrot.lane.b32.xlu0 %v409, 1
      %v411 = vpop.permute.xlu0 %410
      %v412 = vlaneseq
      %v413 = vshrl.u32 %v412, 7
      %v414 = vsub.s32 0, %v413
      %v415 = vrot.slane %v411, %v414
      %v416 = vsel %vm405, %v415, %v408
      %v417 = vsel %vm404, %v416, %v407
      %v418 = vsub.f32 %v362, %v417
      %v419 = vld [vmem:[%s332] sm:$0xff]
      %420 = vrot.lane.b32.xlu0 %v419, 1
      %v421 = vpop.permute.xlu0 %420
      %v422 = vrot.slane %v421, 7
      %s423 = scalar_lea.vmem [#allocation3], 1
      %v424 = vld [vmem:[%s423] sm:$0x1]
      %425 = vrot.lane.b32.xlu0 %v424, 1
      %v426 = vpop.permute.xlu0 %425
      %v427 = vlaneseq
      %v428 = vshrl.u32 %v427, 7
      %v429 = vsub.s32 0, %v428
      %v430 = vrot.slane %v426, %v429
      %v431 = vsel %vm405, %v430, %v422
      %v432 = vsel %vm404, %v431, %v421
      %v433 = vsub.f32 %v419, %v432
      %v434 = vmul.f32 %v433, %v433
      %s435 = scalar_lea.vmem %s332, 8
      %v436 = vld [vmem:[%s435] sm:$0xff]
      %437 = vrot.lane.b32.xlu0 %v436, 1
      %v438 = vpop.permute.xlu0 %437
      %v439 = vrot.slane %v438, 7
      %s440 = scalar_lea.vmem [#allocation3], 2
      %v441 = vld [vmem:[%s440] sm:$0x1]
      %442 = vrot.lane.b32.xlu0 %v441, 1
      %v443 = vpop.permute.xlu0 %442
      %v444 = vlaneseq
      %v445 = vshrl.u32 %v444, 7
      %v446 = vsub.s32 0, %v445
      %v447 = vrot.slane %v443, %v446
      %v448 = vsel %vm405, %v447, %v439
      %v449 = vsel %vm404, %v448, %v438
      %v450 = vsub.f32 %v436, %v449
      %v451 = vmul.f32 %v450, %v450
      %v452 = vadd.f32 %v434, %v451
      %s453 = scalar_lea.vmem %s332, 16
      %v454 = vld [vmem:[%s453] sm:$0xff]
      %455 = vrot.lane.b32.xlu0 %v454, 1
      %v456 = vpop.permute.xlu0 %455
      %v457 = vrot.slane %v456, 7
      %s458 = scalar_lea.vmem [#allocation3], 3
      %v459 = vld [vmem:[%s458] sm:$0x1]
      %460 = vrot.lane.b32.xlu0 %v459, 1
      %v461 = vpop.permute.xlu0 %460
      %v462 = vlaneseq
      %v463 = vshrl.u32 %v462, 7
      %v464 = vsub.s32 0, %v463
      %v465 = vrot.slane %v461, %v464
      %v466 = vsel %vm405, %v465, %v457
      %v467 = vsel %vm404, %v466, %v456
      %v468 = vsub.f32 %v454, %v467
      %v469 = vmul.f32 %v468, %v468
      %v470 = vadd.f32 %v452, %v469
      %v471 = vrsqrt.pop %v470
      %v472 = vmul.f32 %v418, %v471
      %vm473 = vcmp.gt.f32.partialorder %v472, 0.0
      %v474 = vadd.f32 %v472, 1.0
      %v475 = vand.u32 2147483647, %v474
      %v476 = vsel %vm473, 1.0, %v475
      %p477 = scmp.gt.s32.totalorder %s19, 0
      %p478 = pnand %p477, %p340
      %p479 = pneg %p478
      %vm480 = vmand %vm405, %vm404
      %s481 = scalar_select %p479, 1, 0
      %v482 = vstv %s481
      %vm483 = vcmp.eq.s32.totalorder %v482, 1
      %vm484 = vmand %vm483, %vm480
      %vm485 = vcmp.ge.s32.totalorder %v360, 1
      %vm486 = vmand %vm485, %vm361
      %vm487 = vmxor %vm484, 1
      %vm488 = vmand %vm486, %vm487
      %v489 = vsel %vm488, %v476, 0.0
      %490 = vst [vmem:[#allocation3 - $0x7] sm:$0x80] %v362
      %v491 = vld [vmem:[%s332 + $0x7] sm:$0x1]
      %492 = vst [vmem:[%s423] sm:$0x1] %v491
      %v493 = vld [vmem:[%s435 + $0x7] sm:$0x1]
      %494 = vst [vmem:[%s440] sm:$0x1] %v493
      %v495 = vld [vmem:[%s453 + $0x7] sm:$0x1]
      %496 = vst [vmem:[%s458] sm:$0x1] %v495
      %v497 = vld [vmem:[#allocation2] sm:$0xff]
      %v498 = vadd.f32 %v497, %v400
      %499 = vst [vmem:[#allocation2] sm:$0xff] %v498
      %s500 = scalar_lea.vmem [#allocation2], 8
      %v501 = vld [vmem:[%s500] sm:$0xff]
      %v502 = vadd.f32 %v501, %v403
      %503 = vst [vmem:[%s500] sm:$0xff] %v502
      %s504 = scalar_lea.vmem [#allocation2], 16
      %v505 = vld [vmem:[%s504] sm:$0xff]
      %v506 = vadd.f32 %v505, %v489
      %507 = vst [vmem:[%s504] sm:$0xff] %v506
      // Predicated region
      $region41: #{ray_model_forward.1} parent=35 // pred_check
        %p508 = pneg %p340
      $region42: #{ray_model_forward.1} parent=35 // pred_check_branch
        %510 = sbr.rel (%p508) target = $region44
      $region43: #{ray_model_forward.1} parent=35 // pred_region
        %v511 = vld [vmem:[#allocation2] sm:$0xff]
        %512 = vadd.xlane.f32.xlu0 %v511
        %v513 = vpop.xlane.xlu0 %512
        %v514 = vrot.slane %v513, 4
        %v515 = vadd.f32 %v513, %v514
        %v516 = vrot.slane %v515, 2
        %v517 = vadd.f32 %v515, %v516
        %v518 = vrot.slane %v517, 1
        %v519 = vadd.f32 %v517, %v518
        %s520 = vtos %v519
        %v521 = vld [vmem:[%s500] sm:$0xff]
        %522 = vadd.xlane.f32.xlu0 %v521
        %v523 = vpop.xlane.xlu0 %522
        %v524 = vrot.slane %v523, 4
        %v525 = vadd.f32 %v523, %v524
        %v526 = vrot.slane %v525, 2
        %v527 = vadd.f32 %v525, %v526
        %v528 = vrot.slane %v527, 1
        %v529 = vadd.f32 %v527, %v528
        %s530 = vtos %v529
        %v531 = vld [vmem:[%s504] sm:$0xff]
        %532 = vadd.xlane.f32.xlu0 %v531
        %v533 = vpop.xlane.xlu0 %532
        %v534 = vrot.slane %v533, 4
        %v535 = vadd.f32 %v533, %v534
        %v536 = vrot.slane %v535, 2
        %v537 = vadd.f32 %v535, %v536
        %v538 = vrot.slane %v537, 1
        %v539 = vadd.f32 %v537, %v538
        %s540 = vtos %v539
        %vm541 = vcmp.eq.s32.totalorder %v354, 1
        %vm542 = vmand %vm405, %vm541
        %vm543 = vcmp.eq.s32.totalorder %v354, 2
        %vm544 = vmand %vm405, %vm543
        %v545 = vstv %s540
        %v546 = vsel %vm544, %v545, 0.0
        %v547 = vstv %s530
        %v548 = vsel %vm542, %v547, %v546
        %v549 = vstv %s520
        %v550 = vsel %vm480, %v549, %v548
        %551 = vst [vmem:[%s339] sm:$0xff] %v550
      $region44: #{ray_model_forward.1} parent=35 // pred_fallthru
        _
      %p552 = scmp.lt.s32.totalorder %s19, 1
      %s553 = scalar_select %p552, %s19, 1
      %s554 = smul.addr %s553, 8
      %s555 = scalar_lea.vmem %s4, %s554
      // Predicated region
      $region45: #{ray_model_forward.1} parent=35 // pred_check
        %p556 = pneg %p173
      $region46: #{ray_model_forward.1} parent=35 // pred_check_branch
        %558 = sbr.rel (%p556) target = $region48
      $region47: #{ray_model_forward.1} parent=35 // pred_region
        _
      $region48: #{ray_model_forward.1} parent=35 // pred_fallthru
        _
    $region36: #{ray_model_forward.1} parent=5 // pred_fallthru
      _
    %p559 = scmp.le.s32.totalorder 2, %s10
    // Predicated region
    $region49: #{ray_model_forward.1} parent=5 // pred_check
      %p560 = pneg %p559
    $region50: #{ray_model_forward.1} parent=5 // pred_check_branch
      %562 = sbr.rel (%p560) target = $region52
    $region51: #{ray_model_forward.1} parent=5 // pred_region
      %s563 = ssub.s32 %s10, 2
      // Predicated region
      $region53: #{ray_model_forward.1} parent=51 // pred_check
        %p564 = pneg %p179
      $region54: #{ray_model_forward.1} parent=51 // pred_check_branch
        %566 = sbr.rel (%p564) target = $region56
      $region55: #{ray_model_forward.1} parent=51 // pred_region
        %p567 = scmp.lt.s32.totalorder %s21, 1
        %s568 = scalar_select %p567, %s21, 1
        %s569 = smul.addr %s568, 8
        %s570 = scalar_lea.vmem %s4, %s569
      $region56: #{ray_model_forward.1} parent=51 // pred_fallthru
        _
    $region52: #{ray_model_forward.1} parent=5 // pred_fallthru
      _
  $region6: #{ray_model_forward.1} parent=0 // loop_footer
    %s14 = sadd.s32 1, %s10
  $region7: #{ray_model_forward.1} parent=0 // loop_footer_branch
    %9 = sbr.rel target = $region3
  $region8: #{ray_model_forward.1} parent=0 // loop_exit
    _

</llo_original>
